<compile_context>
chip_gen: v7x
topology: tpu7x:2x2x1
jax: 0.10.0
libtpu: 0.0.40
codegen_flags: <defaults>
</compile_context>

<pallas_src>
import functools
import math

import jax
import jax.numpy as jnp
from jax import lax
from jax.experimental import pallas as pl
from jax.experimental.pallas import tpu as pltpu


# ----------------------------------------------------------------------------
# Kernel: y[b, s, n] = sum_c x[b, c, s] * w[c, n] + bias[n]
# (== x.flatten(2).transpose(1, 2) @ W.T + b for a PyTorch Linear)
# ----------------------------------------------------------------------------
def _mlp_kernel(x_ref, w_ref, b_ref, o_ref):
    # x_ref: (Bt, C, TS)  batch tile of activations, native NCHW-flattened layout
    # w_ref: (C,  N)      weight (grid-invariant, VMEM resident)
    # b_ref: (1,  N)      bias (f32)
    # o_ref: (Bt, TS, N)  lane-dense output tile (N is a multiple of 128)
    w = w_ref[...]
    b = b_ref[...]
    # Static unroll over the small batch tile: each step is one MXU matmul
    # contracting the channel axis of a (C, TS) slab.
    # TODO(synk): if bundle dumps show a per-tile vxpose from the transposed-lhs
    # contraction AND the kernel goes compute-bound after the bf16 switch
    # (most likely on v5e), present the lhs as (TS, C) instead.
    for i in range(x_ref.shape[0]):
        y = lax.dot_general(
            x_ref[i], w,
            dimension_numbers=(((0,), (0,)), ((), ())),   # contract channel dim
            preferred_element_type=jnp.float32)           # f32 MXU accumulation
        o_ref[i] = (y + b).astype(o_ref.dtype)


# ----------------------------------------------------------------------------
# Tiling heuristics
# ----------------------------------------------------------------------------
def _choose_seq_tile(seq, in_itemsize):
    """Lane-aligned seq tile.  Full extent when small (always a legal block),
    otherwise a 256-multiple cap so huge S (e.g. 224x224 -> 50176) never blows
    VMEM (v7x has only 64 MiB).  The ragged last tile is handled by the cdiv
    grid + masked edge writes."""
    cap = 1024 if in_itemsize <= 2 else 512     # bf16 vs f32 operands
    return int(seq) if seq <= cap else cap


def _choose_batch_tile(batch, cin, ts, nout, in_itemsize, out_itemsize):
    """Batch several rows per grid step to amortize per-step overhead and give
    the DMA engine larger transfers, keeping the per-step working set <= ~8 MiB
    (safe for v7x 64 MiB VMEM and v5e's 16 MiB default scoped limit)."""
    budget = 8 << 20
    per_b = cin * ts * in_itemsize + ts * nout * out_itemsize
    bt = max(1, min(8, budget // max(per_b, 1)))
    bt = min(bt, batch)
    while bt > 1 and batch % bt != 0:           # avoid a ragged batch edge when cheap
        bt -= 1
    return int(bt)


# ----------------------------------------------------------------------------
# pallas_call builder
# ----------------------------------------------------------------------------
_TRY_BUFFERED = hasattr(pl, "Buffered")         # single-buffer grid-invariant operands


@functools.lru_cache(maxsize=None)
def _mlp_call(batch, cin, seq, nout, bt, ts, in_dtype_name, out_dtype_name, buffered):
    in_dtype = jnp.dtype(in_dtype_name)
    out_dtype = jnp.dtype(out_dtype_name)

    def const_spec(shape):
        if buffered:
            # Weight/bias index_map is constant across the grid; the second
            # pipeline buffer would be dead VMEM.
            return pl.BlockSpec(shape, lambda b, s: (0, 0),
                                pipeline_mode=pl.Buffered(1))
        return pl.BlockSpec(shape, lambda b, s: (0, 0))

    x_tile = bt * cin * ts * in_dtype.itemsize
    o_tile = bt * ts * nout * out_dtype.itemsize
    w_bytes = cin * nout * in_dtype.itemsize
    b_bytes = nout * 4
    vmem_limit = 2 * (x_tile + o_tile) + 2 * (w_bytes + b_bytes) + (4 << 20)
    vmem_limit = int(max(16 << 20, min(vmem_limit, 100 << 20)))

    cost = pl.CostEstimate(
        flops=2 * batch * seq * cin * nout,
        transcendentals=0,
        bytes_accessed=(batch * cin * seq * in_dtype.itemsize + w_bytes + b_bytes
                        + batch * seq * nout * out_dtype.itemsize))

    return pl.pallas_call(
        _mlp_kernel,
        out_shape=jax.ShapeDtypeStruct((batch, seq, nout), out_dtype),
        grid=(pl.cdiv(batch, bt), pl.cdiv(seq, ts)),
        in_specs=[
            pl.BlockSpec((bt, cin, ts), lambda b, s: (b, 0, s)),
            const_spec((cin, nout)),
            const_spec((1, nout)),
        ],
        out_specs=pl.BlockSpec((bt, ts, nout), lambda b, s: (b, s, 0)),
        compiler_params=pltpu.CompilerParams(
            dimension_semantics=("parallel", "parallel"),
            vmem_limit_bytes=vmem_limit),
        cost_estimate=cost,
    )


# ----------------------------------------------------------------------------
# Wrapper
# ----------------------------------------------------------------------------
def mlp_forward(params, x, out_dtype=None):
    """x: (B, C, *spatial) NCHW-style.  Returns (B, prod(spatial), embed_dim),
    i.e. x.flatten(2).transpose(1, 2) @ W^T + b.
    Pass out_dtype=jnp.bfloat16 to halve the output HBM stream if downstream
    tolerates it (default matches the input dtype, like nn.Linear)."""
    global _TRY_BUFFERED
    w, b = params["w"], params["b"]              # (C, N) compute dtype, (1, N) f32
    b_sz, cin = x.shape[0], x.shape[1]
    seq = 1
    for d in x.shape[2:]:
        seq *= d
    nout = w.shape[1]
    assert w.shape[0] == cin, "input_dim mismatch"

    compute_dtype = jnp.dtype(w.dtype)           # bf16 by default (f32 MXU accum)
    out_dt = jnp.dtype(out_dtype) if out_dtype is not None else jnp.dtype(x.dtype)

    # flatten(2) is a pure reshape; cast once here so the HBM array is already bf16.
    x3 = x.reshape(b_sz, cin, seq).astype(compute_dtype)

    ts = _choose_seq_tile(seq, compute_dtype.itemsize)
    bt = _choose_batch_tile(b_sz, cin, ts, nout,
                            compute_dtype.itemsize, out_dt.itemsize)

    if _TRY_BUFFERED:
        try:
            call = _mlp_call(b_sz, cin, seq, nout, bt, ts,
                             compute_dtype.name, out_dt.name, True)
            return call(x3, w, b)
        except Exception:
            # Older JAX without BlockSpec pipeline_mode support; retry plain.
            _TRY_BUFFERED = False
    call = _mlp_call(b_sz, cin, seq, nout, bt, ts,
                     compute_dtype.name, out_dt.name, False)
    return call(x3, w, b)


# ----------------------------------------------------------------------------
# Deterministic parameter construction (matches nn.Linear default init)
# ----------------------------------------------------------------------------
def init_mlp(seed, input_dim, embed_dim, param_dtype=jnp.bfloat16):
    """Weight stored transposed (C, N) in the kernel compute dtype (bf16 by
    default -> native MXU datapath, half the weight DMA bytes); bias kept f32,
    pre-reshaped to (1, N), so the hot path never re-casts parameters.
    Use param_dtype=jnp.float32 for exact nn.Linear f32 numerics."""
    k1, k2 = jax.random.split(jax.random.PRNGKey(seed))
    bound = 1.0 / math.sqrt(input_dim)
    w = jax.random.uniform(k1, (input_dim, embed_dim), jnp.float32, -bound, bound)
    b = jax.random.uniform(k2, (embed_dim,), jnp.float32, -bound, bound)
    return {"w": w.astype(param_dtype), "b": b.reshape(1, embed_dim)}


# ----------------------------------------------------------------------------
if __name__ == "__main__":
    B, INPUT_DIM, H, W = 2, 128, 8, 8          # small shapes consistent w/ module
    EMBED_DIM = 256                            # lane-dense output (multiple of 128)

    x = 0.5 * jax.random.normal(jax.random.PRNGKey(0),
                                (B, INPUT_DIM, H, W), jnp.float32)
    params = init_mlp(1234, INPUT_DIM, EMBED_DIM)          # bf16 weight, f32 bias

    out = mlp_forward(params, x)                           # f32 output
    jax.block_until_ready(out)

    # Reference with identical operand precision (bf16 x/w, f32 accumulation).
    S = H * W
    x_bf = x.reshape(B, INPUT_DIM, S).astype(jnp.bfloat16).astype(jnp.float32)
    w_f32 = params["w"].astype(jnp.float32)
    ref = jnp.einsum("bcs,cn->bsn", x_bf, w_f32,
                     precision=lax.Precision.HIGHEST) + params["b"]

    assert out.shape == (B, S, EMBED_DIM)
    assert out.dtype == x.dtype
    assert bool(jnp.all(jnp.isfinite(out)))
    assert bool(jnp.allclose(out, ref, atol=5e-3, rtol=5e-3))
    print("KERNEL_OK")
</pallas_src>

<mosaic_0001>
module attributes {stable_mosaic.version = 11 : i64} {
  func.func @_mlp_kernel(%arg0: i32, %arg1: i32, %arg2: memref<2x128x64xbf16, #tpu.memory_space<vmem>>, %arg3: memref<128x256xbf16, #tpu.memory_space<vmem>>, %arg4: memref<1x256xf32, #tpu.memory_space<vmem>>, %arg5: memref<2x64x256xf32, #tpu.memory_space<vmem>>) attributes {dimension_semantics = [#tpu.dimension_semantics<parallel>, #tpu.dimension_semantics<parallel>], iteration_bounds = array<i64: 1, 1>, scalar_prefetch = 0 : i64, scratch_operands = 0 : i64, tpu.core_type = #tpu.core_type<tc>, window_params = [{transform_indices = @transform_0, window_bounds = array<i64: 2, 128, 64>}, {pipeline_mode = #tpu.pipeline_mode<synchronous>, transform_indices = @transform_1, window_bounds = array<i64: 128, 256>}, {pipeline_mode = #tpu.pipeline_mode<synchronous>, transform_indices = @transform_2, window_bounds = array<i64: 1, 256>}, {transform_indices = @transform_3, window_bounds = array<i64: 2, 64, 256>}]} {
    %c0 = arith.constant 0 : index
    %c0_0 = arith.constant 0 : index
    %0 = vector.load %arg3[%c0, %c0_0] : memref<128x256xbf16, #tpu.memory_space<vmem>>, vector<128x256xbf16>
    %c0_1 = arith.constant 0 : index
    %c0_2 = arith.constant 0 : index
    %1 = vector.load %arg4[%c0_1, %c0_2] : memref<1x256xf32, #tpu.memory_space<vmem>>, vector<1x256xf32>
    %c0_3 = arith.constant 0 : index
    %c0_4 = arith.constant 0 : index
    %c0_5 = arith.constant 0 : index
    %2 = vector.load %arg2[%c0_3, %c0_4, %c0_5] : memref<2x128x64xbf16, #tpu.memory_space<vmem>>, vector<1x128x64xbf16>
    %3 = vector.shape_cast %2 : vector<1x128x64xbf16> to vector<128x64xbf16>
    %cst = arith.constant dense<0.000000e+00> : vector<64x256xf32>
    %4 = tpu.matmul %3, %0, %cst {dimension_numbers = #tpu.dot_dimension_numbers<[0], [0], [1], [1], [0, 1, 1, 1], [], []>} : vector<128x64xbf16>, vector<128x256xbf16>, vector<64x256xf32> -> vector<64x256xf32>
    %5 = vector.broadcast %1 : vector<1x256xf32> to vector<64x256xf32>
    %6 = arith.addf %4, %5 : vector<64x256xf32>
    %c0_6 = arith.constant 0 : index
    %c0_7 = arith.constant 0 : index
    %c0_8 = arith.constant 0 : index
    %7 = vector.load %arg5[%c0_6, %c0_7, %c0_8] : memref<2x64x256xf32, #tpu.memory_space<vmem>>, vector<1x64x256xf32>
    %8 = vector.shape_cast %7 : vector<1x64x256xf32> to vector<64x256xf32>
    %9 = vector.shape_cast %6 : vector<64x256xf32> to vector<1x64x256xf32>
    tpu.vector_store %arg5[%c0_6, %c0_7, %c0_8], %9 {strides = array<i32>} : memref<2x64x256xf32, #tpu.memory_space<vmem>>, vector<1x64x256xf32>,
    %c1 = arith.constant 1 : index
    %c0_9 = arith.constant 0 : index
    %c0_10 = arith.constant 0 : index
    %10 = vector.load %arg2[%c1, %c0_9, %c0_10] : memref<2x128x64xbf16, #tpu.memory_space<vmem>>, vector<1x128x64xbf16>
    %11 = vector.shape_cast %10 : vector<1x128x64xbf16> to vector<128x64xbf16>
    %cst_11 = arith.constant dense<0.000000e+00> : vector<64x256xf32>
    %12 = tpu.matmul %11, %0, %cst_11 {dimension_numbers = #tpu.dot_dimension_numbers<[0], [0], [1], [1], [0, 1, 1, 1], [], []>} : vector<128x64xbf16>, vector<128x256xbf16>, vector<64x256xf32> -> vector<64x256xf32>
    %13 = vector.broadcast %1 : vector<1x256xf32> to vector<64x256xf32>
    %14 = arith.addf %12, %13 : vector<64x256xf32>
    %c1_12 = arith.constant 1 : index
    %c0_13 = arith.constant 0 : index
    %c0_14 = arith.constant 0 : index
    %15 = vector.load %arg5[%c1_12, %c0_13, %c0_14] : memref<2x64x256xf32, #tpu.memory_space<vmem>>, vector<1x64x256xf32>
    %16 = vector.shape_cast %15 : vector<1x64x256xf32> to vector<64x256xf32>
    %17 = vector.shape_cast %14 : vector<64x256xf32> to vector<1x64x256xf32>
    tpu.vector_store %arg5[%c1_12, %c0_13, %c0_14], %17 {strides = array<i32>} : memref<2x64x256xf32, #tpu.memory_space<vmem>>, vector<1x64x256xf32>,
    return
  }
  func.func @transform_0(%arg0: i32, %arg1: i32) -> (i32, i32, i32) {
    %c0_i32 = arith.constant 0 : i32
    %c0_i32_0 = arith.constant 0 : i32
    return %arg0, %c0_i32, %arg1 : i32, i32, i32
  }
  func.func @transform_1(%arg0: i32, %arg1: i32) -> (i32, i32) {
    %c0_i32 = arith.constant 0 : i32
    %c0_i32_0 = arith.constant 0 : i32
    %c0_i32_1 = arith.constant 0 : i32
    return %c0_i32, %c0_i32_0 : i32, i32
  }
  func.func @transform_2(%arg0: i32, %arg1: i32) -> (i32, i32) {
    %c0_i32 = arith.constant 0 : i32
    %c0_i32_0 = arith.constant 0 : i32
    %c0_i32_1 = arith.constant 0 : i32
    return %c0_i32, %c0_i32_0 : i32, i32
  }
  func.func @transform_3(%arg0: i32, %arg1: i32) -> (i32, i32, i32) {
    %c0_i32 = arith.constant 0 : i32
    %c0_i32_0 = arith.constant 0 : i32
    return %arg0, %arg1, %c0_i32 : i32, i32, i32
  }
}

module attributes {stable_mosaic.version = 11 : i64} {
  func.func @_mlp_kernel(%arg0: i32, %arg1: i32, %arg2: memref<2x128x64xbf16, #tpu.memory_space<vmem>>, %arg3: memref<128x256xbf16, #tpu.memory_space<vmem>>, %arg4: memref<1x256xf32, #tpu.memory_space<vmem>>, %arg5: memref<2x64x256xf32, #tpu.memory_space<vmem>>) attributes {dimension_semantics = [#tpu.dimension_semantics<parallel>, #tpu.dimension_semantics<parallel>], iteration_bounds = array<i64: 1, 1>, scalar_prefetch = 0 : i64, scratch_operands = 0 : i64, tpu.core_type = #tpu.core_type<tc>, window_params = [{transform_indices = @transform_0, window_bounds = array<i64: 2, 128, 64>}, {pipeline_mode = #tpu.pipeline_mode<synchronous>, transform_indices = @transform_1, window_bounds = array<i64: 128, 256>}, {pipeline_mode = #tpu.pipeline_mode<synchronous>, transform_indices = @transform_2, window_bounds = array<i64: 1, 256>}, {transform_indices = @transform_3, window_bounds = array<i64: 2, 64, 256>}]} {
    %c0 = arith.constant 0 : index
    %c0_0 = arith.constant 0 : index
    %0 = vector.load %arg3[%c0, %c0_0] : memref<128x256xbf16, #tpu.memory_space<vmem>>, vector<128x256xbf16>
    %c0_1 = arith.constant 0 : index
    %c0_2 = arith.constant 0 : index
    %1 = vector.load %arg4[%c0_1, %c0_2] : memref<1x256xf32, #tpu.memory_space<vmem>>, vector<1x256xf32>
    %c0_3 = arith.constant 0 : index
    %c0_4 = arith.constant 0 : index
    %c0_5 = arith.constant 0 : index
    %2 = vector.load %arg2[%c0_3, %c0_4, %c0_5] : memref<2x128x64xbf16, #tpu.memory_space<vmem>>, vector<1x128x64xbf16>
    %3 = vector.shape_cast %2 : vector<1x128x64xbf16> to vector<128x64xbf16>
    %cst = arith.constant dense<0.000000e+00> : vector<64x256xf32>
    %4 = tpu.matmul %3, %0, %cst {dimension_numbers = #tpu.dot_dimension_numbers<[0], [0], [1], [1], [0, 1, 1, 1], [], []>} : vector<128x64xbf16>, vector<128x256xbf16>, vector<64x256xf32> -> vector<64x256xf32>
    %5 = vector.broadcast %1 : vector<1x256xf32> to vector<64x256xf32>
    %6 = arith.addf %4, %5 : vector<64x256xf32>
    %c0_6 = arith.constant 0 : index
    %c0_7 = arith.constant 0 : index
    %c0_8 = arith.constant 0 : index
    %7 = vector.load %arg5[%c0_6, %c0_7, %c0_8] : memref<2x64x256xf32, #tpu.memory_space<vmem>>, vector<1x64x256xf32>
    %8 = vector.shape_cast %7 : vector<1x64x256xf32> to vector<64x256xf32>
    %9 = vector.shape_cast %6 : vector<64x256xf32> to vector<1x64x256xf32>
    tpu.vector_store %arg5[%c0_6, %c0_7, %c0_8], %9 {strides = array<i32>} : memref<2x64x256xf32, #tpu.memory_space<vmem>>, vector<1x64x256xf32>,
    %c1 = arith.constant 1 : index
    %c0_9 = arith.constant 0 : index
    %c0_10 = arith.constant 0 : index
    %10 = vector.load %arg2[%c1, %c0_9, %c0_10] : memref<2x128x64xbf16, #tpu.memory_space<vmem>>, vector<1x128x64xbf16>
    %11 = vector.shape_cast %10 : vector<1x128x64xbf16> to vector<128x64xbf16>
    %cst_11 = arith.constant dense<0.000000e+00> : vector<64x256xf32>
    %12 = tpu.matmul %11, %0, %cst_11 {dimension_numbers = #tpu.dot_dimension_numbers<[0], [0], [1], [1], [0, 1, 1, 1], [], []>} : vector<128x64xbf16>, vector<128x256xbf16>, vector<64x256xf32> -> vector<64x256xf32>
    %13 = vector.broadcast %1 : vector<1x256xf32> to vector<64x256xf32>
    %14 = arith.addf %12, %13 : vector<64x256xf32>
    %c1_12 = arith.constant 1 : index
    %c0_13 = arith.constant 0 : index
    %c0_14 = arith.constant 0 : index
    %15 = vector.load %arg5[%c1_12, %c0_13, %c0_14] : memref<2x64x256xf32, #tpu.memory_space<vmem>>, vector<1x64x256xf32>
    %16 = vector.shape_cast %15 : vector<1x64x256xf32> to vector<64x256xf32>
    %17 = vector.shape_cast %14 : vector<64x256xf32> to vector<1x64x256xf32>
    tpu.vector_store %arg5[%c1_12, %c0_13, %c0_14], %17 {strides = array<i32>} : memref<2x64x256xf32, #tpu.memory_space<vmem>>, vector<1x64x256xf32>,
    return
  }
  func.func @transform_0(%arg0: i32, %arg1: i32) -> (i32, i32, i32) {
    %c0_i32 = arith.constant 0 : i32
    %c0_i32_0 = arith.constant 0 : i32
    return %arg0, %c0_i32, %arg1 : i32, i32, i32
  }
  func.func @transform_1(%arg0: i32, %arg1: i32) -> (i32, i32) {
    %c0_i32 = arith.constant 0 : i32
    %c0_i32_0 = arith.constant 0 : i32
    %c0_i32_1 = arith.constant 0 : i32
    return %c0_i32, %c0_i32_0 : i32, i32
  }
  func.func @transform_2(%arg0: i32, %arg1: i32) -> (i32, i32) {
    %c0_i32 = arith.constant 0 : i32
    %c0_i32_0 = arith.constant 0 : i32
    %c0_i32_1 = arith.constant 0 : i32
    return %c0_i32, %c0_i32_0 : i32, i32
  }
  func.func @transform_3(%arg0: i32, %arg1: i32) -> (i32, i32, i32) {
    %c0_i32 = arith.constant 0 : i32
    %c0_i32_0 = arith.constant 0 : i32
    return %arg0, %arg1, %c0_i32 : i32, i32, i32
  }
}

</mosaic_0001>

<llo_original>
// kernel: tpu_custom_call.1
$region0: #{tpu_custom_call.1}
  #allocation0 [shape = 'u32[]', space=smem, size = 0x4, offset = 0x4, fixed_abs, tag = 'smem constant byte address 0x4 - core index']
  #allocation1 [shape = 'u32[144,128]{1,0:T(1,128)}', space=vmem, size = 0x12000, scoped, tag = 'internal scratch']
  %s0 = inlined_call_operand.vmem [shape: bf16[2,128,64], index: 0, kind: input, shape index: {}]
  %s1 = inlined_call_operand.vmem [shape: bf16[128,256], index: 1, kind: input, shape index: {}]
  %s2 = inlined_call_operand.vmem [shape: f32[1,256], index: 2, kind: input, shape index: {}]
  %s3 = inlined_call_operand.hbm [shape: f32[2,64,256], index: 3, kind: output, shape index: {}]
  %s4 = sld [smem:[#allocation0]]
  $region22: #{tpu_custom_call.1} parent=0
    _
  %s6 = ssub.s32 1, %s4
  %s7 = scalar_select 0, %s6, %s4
  $region1: #{tpu_custom_call.1} parent=0
    #allocation2 [shape = 'u8[131072]{0}', space=vmem, size = 0x20000, scoped, tag = 'output window, operand 0, single buffered']
    #allocation3 [shape = 's32[1]{0}', space=sflag, size = 0x4, scoped, tag = 'scoped memory for tpu_custom_call.1']
    %8 = vsyncpa [#allocation3], 0
    // Predicated region
    $region2: #{tpu_custom_call.1} parent=1 // pred_check
      _
    $region3: #{tpu_custom_call.1} parent=1 // pred_check_branch
      %10 = sbr.rel (0) target = $region5
    $region4: #{tpu_custom_call.1} parent=1 // pred_region
      _
    $region5: #{tpu_custom_call.1} parent=1 // pred_fallthru
      _
    // Predicated region
    $region6: #{tpu_custom_call.1} parent=1 // pred_check
      _
    $region7: #{tpu_custom_call.1} parent=1 // pred_check_branch
      %12 = sbr.rel (0) target = $region9
    $region8: #{tpu_custom_call.1} parent=1 // pred_region
      _
    $region9: #{tpu_custom_call.1} parent=1 // pred_fallthru
      _
    // Predicated region
    $region10: #{tpu_custom_call.1} parent=1 // pred_check
      _
    $region11: #{tpu_custom_call.1} parent=1 // pred_check_branch
      %14 = sbr.rel (0) target = $region13
    $region12: #{tpu_custom_call.1} parent=1 // pred_region
      _
    $region13: #{tpu_custom_call.1} parent=1 // pred_fallthru
      _
    %v16 = vld [vmem:[%s1] sm:$0xff]
    %v17 = vld [vmem:[%s1 + $0x8] sm:$0xff]
    %v18 = vld [vmem:[%s1 + $0x10] sm:$0xff]
    %v19 = vld [vmem:[%s1 + $0x18] sm:$0xff]
    %v20 = vld [vmem:[%s1 + $0x20] sm:$0xff]
    %v21 = vld [vmem:[%s1 + $0x28] sm:$0xff]
    %v22 = vld [vmem:[%s1 + $0x30] sm:$0xff]
    %v23 = vld [vmem:[%s1 + $0x38] sm:$0xff]
    %v24 = vld [vmem:[%s1 + $0x40] sm:$0xff]
    %v25 = vld [vmem:[%s1 + $0x48] sm:$0xff]
    %v26 = vld [vmem:[%s1 + $0x50] sm:$0xff]
    %v27 = vld [vmem:[%s1 + $0x58] sm:$0xff]
    %v28 = vld [vmem:[%s1 + $0x60] sm:$0xff]
    %v29 = vld [vmem:[%s1 + $0x68] sm:$0xff]
    %v30 = vld [vmem:[%s1 + $0x70] sm:$0xff]
    %v31 = vld [vmem:[%s1 + $0x78] sm:$0xff]
    %v32 = vld [vmem:[%s2] sm:$0x3]
    %v33 = vld [vmem:[%s0] sm:$0xf]
    %v34 = vld [vmem:[%s0 + $0x4] sm:$0xf]
    %v35 = vld [vmem:[%s0 + $0x8] sm:$0xf]
    %v36 = vld [vmem:[%s0 + $0xc] sm:$0xf]
    %v37 = vld [vmem:[%s0 + $0x10] sm:$0xf]
    %v38 = vld [vmem:[%s0 + $0x14] sm:$0xf]
    %v39 = vld [vmem:[%s0 + $0x18] sm:$0xf]
    %v40 = vld [vmem:[%s0 + $0x1c] sm:$0xf]
    %v41 = vld [vmem:[%s0 + $0x20] sm:$0xf]
    %v42 = vld [vmem:[%s0 + $0x24] sm:$0xf]
    %v43 = vld [vmem:[%s0 + $0x28] sm:$0xf]
    %v44 = vld [vmem:[%s0 + $0x2c] sm:$0xf]
    %v45 = vld [vmem:[%s0 + $0x30] sm:$0xf]
    %v46 = vld [vmem:[%s0 + $0x34] sm:$0xf]
    %v47 = vld [vmem:[%s0 + $0x38] sm:$0xf]
    %v48 = vld [vmem:[%s0 + $0x3c] sm:$0xf]
    %v50 = vlaneseq
    %v51 = vshrl.u32 %v50, 7
    %v52 = vsub.s32 0, %v51
    %v53 = vrot.slane %v32, %v52
    %v54 = vlaneseq
    %v55 = vshrl.u32 %v54, 7
    %v56 = vsub.s32 1, %v55
    %v57 = vrot.slane %v32, %v56
    %v76 = vunpack.c.l.b16 %v33
    %v77 = vunpack.c.l.b16 %v34
    %v78 = vunpack.c.l.b16 %v35
    %v79 = vunpack.c.l.b16 %v36
    %v80 = vunpack.c.l.b16 %v37
    %v81 = vunpack.c.l.b16 %v38
    %v82 = vunpack.c.l.b16 %v39
    %v83 = vunpack.c.l.b16 %v40
    %v84 = vunpack.c.l.b16 %v41
    %v85 = vunpack.c.l.b16 %v42
    %v86 = vunpack.c.l.b16 %v43
    %v87 = vunpack.c.l.b16 %v44
    %v88 = vunpack.c.l.b16 %v45
    %v89 = vunpack.c.l.b16 %v46
    %v90 = vunpack.c.l.b16 %v47
    %v91 = vunpack.c.l.b16 %v48
    %v92 = vpack.c.b16 %v77, %v76
    %v93 = vpack.c.b16 %v79, %v78
    %v94 = vpack.c.b16 %v81, %v80
    %v95 = vpack.c.b16 %v83, %v82
    %v96 = vpack.c.b16 %v85, %v84
    %v97 = vpack.c.b16 %v87, %v86
    %v98 = vpack.c.b16 %v89, %v88
    %v99 = vpack.c.b16 %v91, %v90
    %108 = vxpose.xlu0.c.b16.start [1/8] %v92, 128
    %109 = vxpose.xlu0.c.b16.cont [2/8] %v93, 128
    %110 = vxpose.xlu0.c.b16.cont [3/8] %v94, 128
    %111 = vxpose.xlu0.c.b16.cont [4/8] %v95, 128
    %112 = vxpose.xlu0.c.b16.cont [5/8] %v96, 128
    %113 = vxpose.xlu0.c.b16.cont [6/8] %v97, 128
    %114 = vxpose.xlu0.c.b16.cont [7/8] %v98, 128
    %115 = vxpose.xlu0.c.b16.end [8/8] %v99, 128
    %v116 = vpop.trf.xlu0
    %v117 = vpop.trf.xlu0
    %v118 = vpop.trf.xlu0
    %v119 = vpop.trf.xlu0
    %v120 = vpop.trf.xlu0
    %v121 = vpop.trf.xlu0
    %v122 = vpop.trf.xlu0
    %v123 = vpop.trf.xlu0
    %v140 = vunpack.c.l.b16 %v16
    %v141 = vunpack.c.h.b16 %v16
    %v142 = vunpack.c.l.b16 %v17
    %v143 = vunpack.c.h.b16 %v17
    %v144 = vunpack.c.l.b16 %v18
    %v145 = vunpack.c.h.b16 %v18
    %v146 = vunpack.c.l.b16 %v19
    %v147 = vunpack.c.h.b16 %v19
    %v148 = vunpack.c.l.b16 %v20
    %v149 = vunpack.c.h.b16 %v20
    %v150 = vunpack.c.l.b16 %v21
    %v151 = vunpack.c.h.b16 %v21
    %v152 = vunpack.c.l.b16 %v22
    %v153 = vunpack.c.h.b16 %v22
    %v154 = vunpack.c.l.b16 %v23
    %v155 = vunpack.c.h.b16 %v23
    %v156 = vunpack.c.l.b16 %v24
    %v157 = vunpack.c.h.b16 %v24
    %v158 = vunpack.c.l.b16 %v25
    %v159 = vunpack.c.h.b16 %v25
    %v160 = vunpack.c.l.b16 %v26
    %v161 = vunpack.c.h.b16 %v26
    %v162 = vunpack.c.l.b16 %v27
    %v163 = vunpack.c.h.b16 %v27
    %v164 = vunpack.c.l.b16 %v28
    %v165 = vunpack.c.h.b16 %v28
    %v166 = vunpack.c.l.b16 %v29
    %v167 = vunpack.c.h.b16 %v29
    %v168 = vunpack.c.l.b16 %v30
    %v169 = vunpack.c.h.b16 %v30
    %v170 = vunpack.c.l.b16 %v31
    %v171 = vunpack.c.h.b16 %v31
    %v172 = vpack.c.b16 %v142, %v140
    %v173 = vpack.c.b16 %v143, %v141
    %v174 = vpack.c.b16 %v146, %v144
    %v175 = vpack.c.b16 %v147, %v145
    %v176 = vpack.c.b16 %v150, %v148
    %v177 = vpack.c.b16 %v151, %v149
    %v178 = vpack.c.b16 %v154, %v152
    %v179 = vpack.c.b16 %v155, %v153
    %v180 = vpack.c.b16 %v158, %v156
    %v181 = vpack.c.b16 %v159, %v157
    %v182 = vpack.c.b16 %v162, %v160
    %v183 = vpack.c.b16 %v163, %v161
    %v184 = vpack.c.b16 %v166, %v164
    %v185 = vpack.c.b16 %v167, %v165
    %v186 = vpack.c.b16 %v170, %v168
    %v187 = vpack.c.b16 %v171, %v169
    %204 = vmatprep.subr.bf16.mxu0 %v173
    %205 = vmatpush1.bf16.msra.mxu0 %v172
    %206 = vmatprep.subr.bf16.mxu0 %v175
    %207 = vmatpush1.bf16.msra.mxu0 %v174
    %208 = vmatprep.subr.bf16.mxu0 %v177
    %209 = vmatpush1.bf16.msra.mxu0 %v176
    %210 = vmatprep.subr.bf16.mxu0 %v179
    %211 = vmatpush1.bf16.msra.mxu0 %v178
    %212 = vmatprep.subr.bf16.mxu0 %v181
    %213 = vmatpush1.bf16.msra.mxu0 %v180
    %214 = vmatprep.subr.bf16.mxu0 %v183
    %215 = vmatpush1.bf16.msra.mxu0 %v182
    %216 = vmatprep.subr.bf16.mxu0 %v185
    %217 = vmatpush1.bf16.msra.mxu0 %v184
    %218 = vmatprep.subr.bf16.mxu0 %v187
    %219 = vmatpush1.bf16.msra.mxu0 %v186
    %220 = vmatprep.subr.bf16.mxu0 0
    %221 = vmatpush1.bf16.msra.mxu0 0
    %222 = vmatprep.subr.bf16.mxu0 0
    %223 = vmatpush1.bf16.msra.mxu0 0
    %224 = vmatprep.subr.bf16.mxu0 0
    %225 = vmatpush1.bf16.msra.mxu0 0
    %226 = vmatprep.subr.bf16.mxu0 0
    %227 = vmatpush1.bf16.msra.mxu0 0
    %228 = vmatprep.subr.bf16.mxu0 0
    %229 = vmatpush1.bf16.msra.mxu0 0
    %230 = vmatprep.subr.bf16.mxu0 0
    %231 = vmatpush1.bf16.msra.mxu0 0
    %232 = vmatprep.subr.bf16.mxu0 0
    %233 = vmatpush1.bf16.msra.mxu0 0
    %234 = vmatprep.subr.bf16.mxu0 0
    %235 = vmatpush1.bf16.msra.mxu0 0
    %236 = vmatprep.mubr.bf16.mxu0 0
    %237 = vmatmul.mubr.bf16.gmra.mrb[0].mxu0 %v116
    %v238 = vpop.f32.mrb[0].mxu0
    %v239 = vadd.f32 %v53, %v238
    %v240 = vpop.f32.mrb[0].mxu0
    %v241 = vadd.f32 %v57, %v240
    %v242 = vpop.f32.mrb[0].mxu0
    %v243 = vadd.f32 %v53, %v242
    %v244 = vpop.f32.mrb[0].mxu0
    %v245 = vadd.f32 %v57, %v244
    %246 = vmatprep.mubr.bf16.mxu0 0
    %247 = vmatmul.mubr.bf16.gmra.mrb[0].mxu0 %v117
    %v248 = vpop.f32.mrb[0].mxu0
    %v249 = vadd.f32 %v53, %v248
    %v250 = vpop.f32.mrb[0].mxu0
    %v251 = vadd.f32 %v57, %v250
    %v252 = vpop.f32.mrb[0].mxu0
    %v253 = vadd.f32 %v53, %v252
    %v254 = vpop.f32.mrb[0].mxu0
    %v255 = vadd.f32 %v57, %v254
    %256 = vmatprep.mubr.bf16.mxu0 0
    %257 = vmatmul.mubr.bf16.gmra.mrb[0].mxu0 %v118
    %v258 = vpop.f32.mrb[0].mxu0
    %v259 = vadd.f32 %v53, %v258
    %v260 = vpop.f32.mrb[0].mxu0
    %v261 = vadd.f32 %v57, %v260
    %v262 = vpop.f32.mrb[0].mxu0
    %v263 = vadd.f32 %v53, %v262
    %v264 = vpop.f32.mrb[0].mxu0
    %v265 = vadd.f32 %v57, %v264
    %266 = vmatprep.mubr.bf16.mxu0 0
    %267 = vmatmul.mubr.bf16.gmra.mrb[0].mxu0 %v119
    %v268 = vpop.f32.mrb[0].mxu0
    %v269 = vadd.f32 %v53, %v268
    %v270 = vpop.f32.mrb[0].mxu0
    %v271 = vadd.f32 %v57, %v270
    %v272 = vpop.f32.mrb[0].mxu0
    %v273 = vadd.f32 %v53, %v272
    %v274 = vpop.f32.mrb[0].mxu0
    %v275 = vadd.f32 %v57, %v274
    %276 = vdwg.mxu0
    %277 = vst [vmem:[#allocation2] sm:$0xff] %v239
    %278 = vst [vmem:[#allocation2 + $0x8] sm:$0xff] %v241
    %279 = vst [vmem:[#allocation2 + $0x10] sm:$0xff] %v243
    %280 = vst [vmem:[#allocation2 + $0x18] sm:$0xff] %v245
    %281 = vst [vmem:[#allocation2 + $0x20] sm:$0xff] %v249
    %282 = vst [vmem:[#allocation2 + $0x28] sm:$0xff] %v251
    %283 = vst [vmem:[#allocation2 + $0x30] sm:$0xff] %v253
    %284 = vst [vmem:[#allocation2 + $0x38] sm:$0xff] %v255
    %285 = vst [vmem:[#allocation2 + $0x40] sm:$0xff] %v259
    %286 = vst [vmem:[#allocation2 + $0x48] sm:$0xff] %v261
    %287 = vst [vmem:[#allocation2 + $0x50] sm:$0xff] %v263
    %288 = vst [vmem:[#allocation2 + $0x58] sm:$0xff] %v265
    %289 = vst [vmem:[#allocation2 + $0x60] sm:$0xff] %v269
    %290 = vst [vmem:[#allocation2 + $0x68] sm:$0xff] %v271
    %291 = vst [vmem:[#allocation2 + $0x70] sm:$0xff] %v273
    %292 = vst [vmem:[#allocation2 + $0x78] sm:$0xff] %v275
    %s293 = scalar_lea.vmem %s0, 64
    %v294 = vld [vmem:[%s293] sm:$0xf]
    %v295 = vld [vmem:[%s293 + $0x4] sm:$0xf]
    %v296 = vld [vmem:[%s293 + $0x8] sm:$0xf]
    %v297 = vld [vmem:[%s293 + $0xc] sm:$0xf]
    %v298 = vld [vmem:[%s293 + $0x10] sm:$0xf]
    %v299 = vld [vmem:[%s293 + $0x14] sm:$0xf]
    %v300 = vld [vmem:[%s293 + $0x18] sm:$0xf]
    %v301 = vld [vmem:[%s293 + $0x1c] sm:$0xf]
    %v302 = vld [vmem:[%s293 + $0x20] sm:$0xf]
    %v303 = vld [vmem:[%s293 + $0x24] sm:$0xf]
    %v304 = vld [vmem:[%s293 + $0x28] sm:$0xf]
    %v305 = vld [vmem:[%s293 + $0x2c] sm:$0xf]
    %v306 = vld [vmem:[%s293 + $0x30] sm:$0xf]
    %v307 = vld [vmem:[%s293 + $0x34] sm:$0xf]
    %v308 = vld [vmem:[%s293 + $0x38] sm:$0xf]
    %v309 = vld [vmem:[%s293 + $0x3c] sm:$0xf]
    %v326 = vunpack.c.l.b16 %v294
    %v327 = vunpack.c.l.b16 %v295
    %v328 = vunpack.c.l.b16 %v296
    %v329 = vunpack.c.l.b16 %v297
    %v330 = vunpack.c.l.b16 %v298
    %v331 = vunpack.c.l.b16 %v299
    %v332 = vunpack.c.l.b16 %v300
    %v333 = vunpack.c.l.b16 %v301
    %v334 = vunpack.c.l.b16 %v302
    %v335 = vunpack.c.l.b16 %v303
    %v336 = vunpack.c.l.b16 %v304
    %v337 = vunpack.c.l.b16 %v305
    %v338 = vunpack.c.l.b16 %v306
    %v339 = vunpack.c.l.b16 %v307
    %v340 = vunpack.c.l.b16 %v308
    %v341 = vunpack.c.l.b16 %v309
    %v342 = vpack.c.b16 %v327, %v326
    %v343 = vpack.c.b16 %v329, %v328
    %v344 = vpack.c.b16 %v331, %v330
    %v345 = vpack.c.b16 %v333, %v332
    %v346 = vpack.c.b16 %v335, %v334
    %v347 = vpack.c.b16 %v337, %v336
    %v348 = vpack.c.b16 %v339, %v338
    %v349 = vpack.c.b16 %v341, %v340
    %358 = vxpose.xlu0.c.b16.start [1/8] %v342, 128
    %359 = vxpose.xlu0.c.b16.cont [2/8] %v343, 128
    %360 = vxpose.xlu0.c.b16.cont [3/8] %v344, 128
    %361 = vxpose.xlu0.c.b16.cont [4/8] %v345, 128
    %362 = vxpose.xlu0.c.b16.cont [5/8] %v346, 128
    %363 = vxpose.xlu0.c.b16.cont [6/8] %v347, 128
    %364 = vxpose.xlu0.c.b16.cont [7/8] %v348, 128
    %365 = vxpose.xlu0.c.b16.end [8/8] %v349, 128
    %v366 = vpop.trf.xlu0
    %v367 = vpop.trf.xlu0
    %v368 = vpop.trf.xlu0
    %v369 = vpop.trf.xlu0
    %v370 = vpop.trf.xlu0
    %v371 = vpop.trf.xlu0
    %v372 = vpop.trf.xlu0
    %v373 = vpop.trf.xlu0
    %374 = vmatprep.subr.bf16.mxu0 %v173
    %375 = vmatpush1.bf16.msra.mxu0 %v172
    %376 = vmatprep.subr.bf16.mxu0 %v175
    %377 = vmatpush1.bf16.msra.mxu0 %v174
    %378 = vmatprep.subr.bf16.mxu0 %v177
    %379 = vmatpush1.bf16.msra.mxu0 %v176
    %380 = vmatprep.subr.bf16.mxu0 %v179
    %381 = vmatpush1.bf16.msra.mxu0 %v178
    %382 = vmatprep.subr.bf16.mxu0 %v181
    %383 = vmatpush1.bf16.msra.mxu0 %v180
    %384 = vmatprep.subr.bf16.mxu0 %v183
    %385 = vmatpush1.bf16.msra.mxu0 %v182
    %386 = vmatprep.subr.bf16.mxu0 %v185
    %387 = vmatpush1.bf16.msra.mxu0 %v184
    %388 = vmatprep.subr.bf16.mxu0 %v187
    %389 = vmatpush1.bf16.msra.mxu0 %v186
    %390 = vmatprep.subr.bf16.mxu0 0
    %391 = vmatpush1.bf16.msra.mxu0 0
    %392 = vmatprep.subr.bf16.mxu0 0
    %393 = vmatpush1.bf16.msra.mxu0 0
    %394 = vmatprep.subr.bf16.mxu0 0
    %395 = vmatpush1.bf16.msra.mxu0 0
    %396 = vmatprep.subr.bf16.mxu0 0
    %397 = vmatpush1.bf16.msra.mxu0 0
    %398 = vmatprep.subr.bf16.mxu0 0
    %399 = vmatpush1.bf16.msra.mxu0 0
    %400 = vmatprep.subr.bf16.mxu0 0
    %401 = vmatpush1.bf16.msra.mxu0 0
    %402 = vmatprep.subr.bf16.mxu0 0
    %403 = vmatpush1.bf16.msra.mxu0 0
    %404 = vmatprep.subr.bf16.mxu0 0
    %405 = vmatpush1.bf16.msra.mxu0 0
    %406 = vmatprep.mubr.bf16.mxu0 0
    %407 = vmatmul.mubr.bf16.gmra.mrb[0].mxu0 %v366
    %v408 = vpop.f32.mrb[0].mxu0
    %v409 = vadd.f32 %v53, %v408
    %v410 = vpop.f32.mrb[0].mxu0
    %v411 = vadd.f32 %v57, %v410
    %v412 = vpop.f32.mrb[0].mxu0
    %v413 = vadd.f32 %v53, %v412
    %v414 = vpop.f32.mrb[0].mxu0
    %v415 = vadd.f32 %v57, %v414
    %416 = vmatprep.mubr.bf16.mxu0 0
    %417 = vmatmul.mubr.bf16.gmra.mrb[0].mxu0 %v367
    %v418 = vpop.f32.mrb[0].mxu0
    %v419 = vadd.f32 %v53, %v418
    %v420 = vpop.f32.mrb[0].mxu0
    %v421 = vadd.f32 %v57, %v420
    %v422 = vpop.f32.mrb[0].mxu0
    %v423 = vadd.f32 %v53, %v422
    %v424 = vpop.f32.mrb[0].mxu0
    %v425 = vadd.f32 %v57, %v424
    %426 = vmatprep.mubr.bf16.mxu0 0
    %427 = vmatmul.mubr.bf16.gmra.mrb[0].mxu0 %v368
    %v428 = vpop.f32.mrb[0].mxu0
    %v429 = vadd.f32 %v53, %v428
    %v430 = vpop.f32.mrb[0].mxu0
    %v431 = vadd.f32 %v57, %v430
    %v432 = vpop.f32.mrb[0].mxu0
    %v433 = vadd.f32 %v53, %v432
    %v434 = vpop.f32.mrb[0].mxu0
    %v435 = vadd.f32 %v57, %v434
    %436 = vmatprep.mubr.bf16.mxu0 0
    %437 = vmatmul.mubr.bf16.gmra.mrb[0].mxu0 %v369
    %v438 = vpop.f32.mrb[0].mxu0
    %v439 = vadd.f32 %v53, %v438
    %v440 = vpop.f32.mrb[0].mxu0
    %v441 = vadd.f32 %v57, %v440
    %v442 = vpop.f32.mrb[0].mxu0
    %v443 = vadd.f32 %v53, %v442
    %v444 = vpop.f32.mrb[0].mxu0
    %v445 = vadd.f32 %v57, %v444
    %446 = vdwg.mxu0
    %s447 = scalar_lea.vmem [#allocation2], 128
    %448 = vst [vmem:[%s447] sm:$0xff] %v409
    %449 = vst [vmem:[%s447 + $0x8] sm:$0xff] %v411
    %450 = vst [vmem:[%s447 + $0x10] sm:$0xff] %v413
    %451 = vst [vmem:[%s447 + $0x18] sm:$0xff] %v415
    %452 = vst [vmem:[%s447 + $0x20] sm:$0xff] %v419
    %453 = vst [vmem:[%s447 + $0x28] sm:$0xff] %v421
    %454 = vst [vmem:[%s447 + $0x30] sm:$0xff] %v423
    %455 = vst [vmem:[%s447 + $0x38] sm:$0xff] %v425
    %456 = vst [vmem:[%s447 + $0x40] sm:$0xff] %v429
    %457 = vst [vmem:[%s447 + $0x48] sm:$0xff] %v431
    %458 = vst [vmem:[%s447 + $0x50] sm:$0xff] %v433
    %459 = vst [vmem:[%s447 + $0x58] sm:$0xff] %v435
    %460 = vst [vmem:[%s447 + $0x60] sm:$0xff] %v439
    %461 = vst [vmem:[%s447 + $0x68] sm:$0xff] %v441
    %462 = vst [vmem:[%s447 + $0x70] sm:$0xff] %v443
    %463 = vst [vmem:[%s447 + $0x78] sm:$0xff] %v445
    // Predicated region
    $region14: #{tpu_custom_call.1} parent=1 // pred_check
      _
    $region15: #{tpu_custom_call.1} parent=1 // pred_check_branch
      %465 = sbr.rel (0) target = $region17
    $region16: #{tpu_custom_call.1} parent=1 // pred_region
      %s467 = ssub.s32 4096, 4096
      %468 = vsyncadd [#allocation3], %s467
      %s469 = sshll.u32 [#allocation2], 4
      %s470 = int_to_ptr.vmem [resolvable:$true] %s469
      %475 = dma.vmem_to_hbm [thread:$0]  %s470, 4096, %s3, [#allocation3], 256, 256, 16
    $region17: #{tpu_custom_call.1} parent=1 // pred_fallthru
      _
    // Predicated region
    $region18: #{tpu_custom_call.1} parent=1 // pred_check
      _
    $region19: #{tpu_custom_call.1} parent=1 // pred_check_branch
      %477 = sbr.rel (0) target = $region21
    $region20: #{tpu_custom_call.1} parent=1 // pred_region
      %478 = dma.done [#allocation3], 4096
    $region21: #{tpu_custom_call.1} parent=1 // pred_fallthru
      _
    %479 = vsyncpa [#allocation3], 1

// kernel: tpu_custom_call.1
$region0: #{tpu_custom_call.1}
  #allocation0 [shape = 'u32[]', space=smem, size = 0x4, offset = 0x4, fixed_abs, tag = 'smem constant byte address 0x4 - core index']
  #allocation1 [shape = 'u32[144,128]{1,0:T(1,128)}', space=vmem, size = 0x12000, scoped, tag = 'internal scratch']
  %s0 = inlined_call_operand.vmem [shape: bf16[2,128,64], index: 0, kind: input, shape index: {}]
  %s1 = inlined_call_operand.vmem [shape: bf16[128,256], index: 1, kind: input, shape index: {}]
  %s2 = inlined_call_operand.vmem [shape: f32[1,256], index: 2, kind: input, shape index: {}]
  %s3 = inlined_call_operand.hbm [shape: f32[2,64,256], index: 3, kind: output, shape index: {}]
  %s4 = sld [smem:[#allocation0]]
  $region22: #{tpu_custom_call.1} parent=0
    _
  %s6 = ssub.s32 1, %s4
  %s7 = scalar_select 0, %s6, %s4
  $region1: #{tpu_custom_call.1} parent=0
    #allocation2 [shape = 'u8[131072]{0}', space=vmem, size = 0x20000, scoped, tag = 'output window, operand 0, single buffered']
    #allocation3 [shape = 's32[1]{0}', space=sflag, size = 0x4, scoped, tag = 'scoped memory for tpu_custom_call.1']
    %8 = vsyncpa [#allocation3], 0
    // Predicated region
    $region2: #{tpu_custom_call.1} parent=1 // pred_check
      _
    $region3: #{tpu_custom_call.1} parent=1 // pred_check_branch
      %10 = sbr.rel (0) target = $region5
    $region4: #{tpu_custom_call.1} parent=1 // pred_region
      _
    $region5: #{tpu_custom_call.1} parent=1 // pred_fallthru
      _
    // Predicated region
    $region6: #{tpu_custom_call.1} parent=1 // pred_check
      _
    $region7: #{tpu_custom_call.1} parent=1 // pred_check_branch
      %12 = sbr.rel (0) target = $region9
    $region8: #{tpu_custom_call.1} parent=1 // pred_region
      _
    $region9: #{tpu_custom_call.1} parent=1 // pred_fallthru
      _
    // Predicated region
    $region10: #{tpu_custom_call.1} parent=1 // pred_check
      _
    $region11: #{tpu_custom_call.1} parent=1 // pred_check_branch
      %14 = sbr.rel (0) target = $region13
    $region12: #{tpu_custom_call.1} parent=1 // pred_region
      _
    $region13: #{tpu_custom_call.1} parent=1 // pred_fallthru
      _
    %v16 = vld [vmem:[%s1] sm:$0xff]
    %v17 = vld [vmem:[%s1 + $0x8] sm:$0xff]
    %v18 = vld [vmem:[%s1 + $0x10] sm:$0xff]
    %v19 = vld [vmem:[%s1 + $0x18] sm:$0xff]
    %v20 = vld [vmem:[%s1 + $0x20] sm:$0xff]
    %v21 = vld [vmem:[%s1 + $0x28] sm:$0xff]
    %v22 = vld [vmem:[%s1 + $0x30] sm:$0xff]
    %v23 = vld [vmem:[%s1 + $0x38] sm:$0xff]
    %v24 = vld [vmem:[%s1 + $0x40] sm:$0xff]
    %v25 = vld [vmem:[%s1 + $0x48] sm:$0xff]
    %v26 = vld [vmem:[%s1 + $0x50] sm:$0xff]
    %v27 = vld [vmem:[%s1 + $0x58] sm:$0xff]
    %v28 = vld [vmem:[%s1 + $0x60] sm:$0xff]
    %v29 = vld [vmem:[%s1 + $0x68] sm:$0xff]
    %v30 = vld [vmem:[%s1 + $0x70] sm:$0xff]
    %v31 = vld [vmem:[%s1 + $0x78] sm:$0xff]
    %v32 = vld [vmem:[%s2] sm:$0x3]
    %v33 = vld [vmem:[%s0] sm:$0xf]
    %v34 = vld [vmem:[%s0 + $0x4] sm:$0xf]
    %v35 = vld [vmem:[%s0 + $0x8] sm:$0xf]
    %v36 = vld [vmem:[%s0 + $0xc] sm:$0xf]
    %v37 = vld [vmem:[%s0 + $0x10] sm:$0xf]
    %v38 = vld [vmem:[%s0 + $0x14] sm:$0xf]
    %v39 = vld [vmem:[%s0 + $0x18] sm:$0xf]
    %v40 = vld [vmem:[%s0 + $0x1c] sm:$0xf]
    %v41 = vld [vmem:[%s0 + $0x20] sm:$0xf]
    %v42 = vld [vmem:[%s0 + $0x24] sm:$0xf]
    %v43 = vld [vmem:[%s0 + $0x28] sm:$0xf]
    %v44 = vld [vmem:[%s0 + $0x2c] sm:$0xf]
    %v45 = vld [vmem:[%s0 + $0x30] sm:$0xf]
    %v46 = vld [vmem:[%s0 + $0x34] sm:$0xf]
    %v47 = vld [vmem:[%s0 + $0x38] sm:$0xf]
    %v48 = vld [vmem:[%s0 + $0x3c] sm:$0xf]
    %v50 = vlaneseq
    %v51 = vshrl.u32 %v50, 7
    %v52 = vsub.s32 0, %v51
    %v53 = vrot.slane %v32, %v52
    %v54 = vlaneseq
    %v55 = vshrl.u32 %v54, 7
    %v56 = vsub.s32 1, %v55
    %v57 = vrot.slane %v32, %v56
    %v76 = vunpack.c.l.b16 %v33
    %v77 = vunpack.c.l.b16 %v34
    %v78 = vunpack.c.l.b16 %v35
    %v79 = vunpack.c.l.b16 %v36
    %v80 = vunpack.c.l.b16 %v37
    %v81 = vunpack.c.l.b16 %v38
    %v82 = vunpack.c.l.b16 %v39
    %v83 = vunpack.c.l.b16 %v40
    %v84 = vunpack.c.l.b16 %v41
    %v85 = vunpack.c.l.b16 %v42
    %v86 = vunpack.c.l.b16 %v43
    %v87 = vunpack.c.l.b16 %v44
    %v88 = vunpack.c.l.b16 %v45
    %v89 = vunpack.c.l.b16 %v46
    %v90 = vunpack.c.l.b16 %v47
    %v91 = vunpack.c.l.b16 %v48
    %v92 = vpack.c.b16 %v77, %v76
    %v93 = vpack.c.b16 %v79, %v78
    %v94 = vpack.c.b16 %v81, %v80
    %v95 = vpack.c.b16 %v83, %v82
    %v96 = vpack.c.b16 %v85, %v84
    %v97 = vpack.c.b16 %v87, %v86
    %v98 = vpack.c.b16 %v89, %v88
    %v99 = vpack.c.b16 %v91, %v90
    %108 = vxpose.xlu0.c.b16.start [1/8] %v92, 128
    %109 = vxpose.xlu0.c.b16.cont [2/8] %v93, 128
    %110 = vxpose.xlu0.c.b16.cont [3/8] %v94, 128
    %111 = vxpose.xlu0.c.b16.cont [4/8] %v95, 128
    %112 = vxpose.xlu0.c.b16.cont [5/8] %v96, 128
    %113 = vxpose.xlu0.c.b16.cont [6/8] %v97, 128
    %114 = vxpose.xlu0.c.b16.cont [7/8] %v98, 128
    %115 = vxpose.xlu0.c.b16.end [8/8] %v99, 128
    %v116 = vpop.trf.xlu0
    %v117 = vpop.trf.xlu0
    %v118 = vpop.trf.xlu0
    %v119 = vpop.trf.xlu0
    %v120 = vpop.trf.xlu0
    %v121 = vpop.trf.xlu0
    %v122 = vpop.trf.xlu0
    %v123 = vpop.trf.xlu0
    %v140 = vunpack.c.l.b16 %v16
    %v141 = vunpack.c.h.b16 %v16
    %v142 = vunpack.c.l.b16 %v17
    %v143 = vunpack.c.h.b16 %v17
    %v144 = vunpack.c.l.b16 %v18
    %v145 = vunpack.c.h.b16 %v18
    %v146 = vunpack.c.l.b16 %v19
    %v147 = vunpack.c.h.b16 %v19
    %v148 = vunpack.c.l.b16 %v20
    %v149 = vunpack.c.h.b16 %v20
    %v150 = vunpack.c.l.b16 %v21
    %v151 = vunpack.c.h.b16 %v21
    %v152 = vunpack.c.l.b16 %v22
    %v153 = vunpack.c.h.b16 %v22
    %v154 = vunpack.c.l.b16 %v23
    %v155 = vunpack.c.h.b16 %v23
    %v156 = vunpack.c.l.b16 %v24
    %v157 = vunpack.c.h.b16 %v24
    %v158 = vunpack.c.l.b16 %v25
    %v159 = vunpack.c.h.b16 %v25
    %v160 = vunpack.c.l.b16 %v26
    %v161 = vunpack.c.h.b16 %v26
    %v162 = vunpack.c.l.b16 %v27
    %v163 = vunpack.c.h.b16 %v27
    %v164 = vunpack.c.l.b16 %v28
    %v165 = vunpack.c.h.b16 %v28
    %v166 = vunpack.c.l.b16 %v29
    %v167 = vunpack.c.h.b16 %v29
    %v168 = vunpack.c.l.b16 %v30
    %v169 = vunpack.c.h.b16 %v30
    %v170 = vunpack.c.l.b16 %v31
    %v171 = vunpack.c.h.b16 %v31
    %v172 = vpack.c.b16 %v142, %v140
    %v173 = vpack.c.b16 %v143, %v141
    %v174 = vpack.c.b16 %v146, %v144
    %v175 = vpack.c.b16 %v147, %v145
    %v176 = vpack.c.b16 %v150, %v148
    %v177 = vpack.c.b16 %v151, %v149
    %v178 = vpack.c.b16 %v154, %v152
    %v179 = vpack.c.b16 %v155, %v153
    %v180 = vpack.c.b16 %v158, %v156
    %v181 = vpack.c.b16 %v159, %v157
    %v182 = vpack.c.b16 %v162, %v160
    %v183 = vpack.c.b16 %v163, %v161
    %v184 = vpack.c.b16 %v166, %v164
    %v185 = vpack.c.b16 %v167, %v165
    %v186 = vpack.c.b16 %v170, %v168
    %v187 = vpack.c.b16 %v171, %v169
    %204 = vmatprep.subr.bf16.mxu0 %v173
    %205 = vmatpush1.bf16.msra.mxu0 %v172
    %206 = vmatprep.subr.bf16.mxu0 %v175
    %207 = vmatpush1.bf16.msra.mxu0 %v174
    %208 = vmatprep.subr.bf16.mxu0 %v177
    %209 = vmatpush1.bf16.msra.mxu0 %v176
    %210 = vmatprep.subr.bf16.mxu0 %v179
    %211 = vmatpush1.bf16.msra.mxu0 %v178
    %212 = vmatprep.subr.bf16.mxu0 %v181
    %213 = vmatpush1.bf16.msra.mxu0 %v180
    %214 = vmatprep.subr.bf16.mxu0 %v183
    %215 = vmatpush1.bf16.msra.mxu0 %v182
    %216 = vmatprep.subr.bf16.mxu0 %v185
    %217 = vmatpush1.bf16.msra.mxu0 %v184
    %218 = vmatprep.subr.bf16.mxu0 %v187
    %219 = vmatpush1.bf16.msra.mxu0 %v186
    %220 = vmatprep.subr.bf16.mxu0 0
    %221 = vmatpush1.bf16.msra.mxu0 0
    %222 = vmatprep.subr.bf16.mxu0 0
    %223 = vmatpush1.bf16.msra.mxu0 0
    %224 = vmatprep.subr.bf16.mxu0 0
    %225 = vmatpush1.bf16.msra.mxu0 0
    %226 = vmatprep.subr.bf16.mxu0 0
    %227 = vmatpush1.bf16.msra.mxu0 0
    %228 = vmatprep.subr.bf16.mxu0 0
    %229 = vmatpush1.bf16.msra.mxu0 0
    %230 = vmatprep.subr.bf16.mxu0 0
    %231 = vmatpush1.bf16.msra.mxu0 0
    %232 = vmatprep.subr.bf16.mxu0 0
    %233 = vmatpush1.bf16.msra.mxu0 0
    %234 = vmatprep.subr.bf16.mxu0 0
    %235 = vmatpush1.bf16.msra.mxu0 0
    %236 = vmatprep.mubr.bf16.mxu0 0
    %237 = vmatmul.mubr.bf16.gmra.mrb[0].mxu0 %v116
    %v238 = vpop.f32.mrb[0].mxu0
    %v239 = vadd.f32 %v53, %v238
    %v240 = vpop.f32.mrb[0].mxu0
    %v241 = vadd.f32 %v57, %v240
    %v242 = vpop.f32.mrb[0].mxu0
    %v243 = vadd.f32 %v53, %v242
    %v244 = vpop.f32.mrb[0].mxu0
    %v245 = vadd.f32 %v57, %v244
    %246 = vmatprep.mubr.bf16.mxu0 0
    %247 = vmatmul.mubr.bf16.gmra.mrb[0].mxu0 %v117
    %v248 = vpop.f32.mrb[0].mxu0
    %v249 = vadd.f32 %v53, %v248
    %v250 = vpop.f32.mrb[0].mxu0
    %v251 = vadd.f32 %v57, %v250
    %v252 = vpop.f32.mrb[0].mxu0
    %v253 = vadd.f32 %v53, %v252
    %v254 = vpop.f32.mrb[0].mxu0
    %v255 = vadd.f32 %v57, %v254
    %256 = vmatprep.mubr.bf16.mxu0 0
    %257 = vmatmul.mubr.bf16.gmra.mrb[0].mxu0 %v118
    %v258 = vpop.f32.mrb[0].mxu0
    %v259 = vadd.f32 %v53, %v258
    %v260 = vpop.f32.mrb[0].mxu0
    %v261 = vadd.f32 %v57, %v260
    %v262 = vpop.f32.mrb[0].mxu0
    %v263 = vadd.f32 %v53, %v262
    %v264 = vpop.f32.mrb[0].mxu0
    %v265 = vadd.f32 %v57, %v264
    %266 = vmatprep.mubr.bf16.mxu0 0
    %267 = vmatmul.mubr.bf16.gmra.mrb[0].mxu0 %v119
    %v268 = vpop.f32.mrb[0].mxu0
    %v269 = vadd.f32 %v53, %v268
    %v270 = vpop.f32.mrb[0].mxu0
    %v271 = vadd.f32 %v57, %v270
    %v272 = vpop.f32.mrb[0].mxu0
    %v273 = vadd.f32 %v53, %v272
    %v274 = vpop.f32.mrb[0].mxu0
    %v275 = vadd.f32 %v57, %v274
    %276 = vdwg.mxu0
    %277 = vst [vmem:[#allocation2] sm:$0xff] %v239
    %278 = vst [vmem:[#allocation2 + $0x8] sm:$0xff] %v241
    %279 = vst [vmem:[#allocation2 + $0x10] sm:$0xff] %v243
    %280 = vst [vmem:[#allocation2 + $0x18] sm:$0xff] %v245
    %281 = vst [vmem:[#allocation2 + $0x20] sm:$0xff] %v249
    %282 = vst [vmem:[#allocation2 + $0x28] sm:$0xff] %v251
    %283 = vst [vmem:[#allocation2 + $0x30] sm:$0xff] %v253
    %284 = vst [vmem:[#allocation2 + $0x38] sm:$0xff] %v255
    %285 = vst [vmem:[#allocation2 + $0x40] sm:$0xff] %v259
    %286 = vst [vmem:[#allocation2 + $0x48] sm:$0xff] %v261
    %287 = vst [vmem:[#allocation2 + $0x50] sm:$0xff] %v263
    %288 = vst [vmem:[#allocation2 + $0x58] sm:$0xff] %v265
    %289 = vst [vmem:[#allocation2 + $0x60] sm:$0xff] %v269
    %290 = vst [vmem:[#allocation2 + $0x68] sm:$0xff] %v271
    %291 = vst [vmem:[#allocation2 + $0x70] sm:$0xff] %v273
    %292 = vst [vmem:[#allocation2 + $0x78] sm:$0xff] %v275
    %s293 = scalar_lea.vmem %s0, 64
    %v294 = vld [vmem:[%s293] sm:$0xf]
    %v295 = vld [vmem:[%s293 + $0x4] sm:$0xf]
    %v296 = vld [vmem:[%s293 + $0x8] sm:$0xf]
    %v297 = vld [vmem:[%s293 + $0xc] sm:$0xf]
    %v298 = vld [vmem:[%s293 + $0x10] sm:$0xf]
    %v299 = vld [vmem:[%s293 + $0x14] sm:$0xf]
    %v300 = vld [vmem:[%s293 + $0x18] sm:$0xf]
    %v301 = vld [vmem:[%s293 + $0x1c] sm:$0xf]
    %v302 = vld [vmem:[%s293 + $0x20] sm:$0xf]
    %v303 = vld [vmem:[%s293 + $0x24] sm:$0xf]
    %v304 = vld [vmem:[%s293 + $0x28] sm:$0xf]
    %v305 = vld [vmem:[%s293 + $0x2c] sm:$0xf]
    %v306 = vld [vmem:[%s293 + $0x30] sm:$0xf]
    %v307 = vld [vmem:[%s293 + $0x34] sm:$0xf]
    %v308 = vld [vmem:[%s293 + $0x38] sm:$0xf]
    %v309 = vld [vmem:[%s293 + $0x3c] sm:$0xf]
    %v326 = vunpack.c.l.b16 %v294
    %v327 = vunpack.c.l.b16 %v295
    %v328 = vunpack.c.l.b16 %v296
    %v329 = vunpack.c.l.b16 %v297
    %v330 = vunpack.c.l.b16 %v298
    %v331 = vunpack.c.l.b16 %v299
    %v332 = vunpack.c.l.b16 %v300
    %v333 = vunpack.c.l.b16 %v301
    %v334 = vunpack.c.l.b16 %v302
    %v335 = vunpack.c.l.b16 %v303
    %v336 = vunpack.c.l.b16 %v304
    %v337 = vunpack.c.l.b16 %v305
    %v338 = vunpack.c.l.b16 %v306
    %v339 = vunpack.c.l.b16 %v307
    %v340 = vunpack.c.l.b16 %v308
    %v341 = vunpack.c.l.b16 %v309
    %v342 = vpack.c.b16 %v327, %v326
    %v343 = vpack.c.b16 %v329, %v328
    %v344 = vpack.c.b16 %v331, %v330
    %v345 = vpack.c.b16 %v333, %v332
    %v346 = vpack.c.b16 %v335, %v334
    %v347 = vpack.c.b16 %v337, %v336
    %v348 = vpack.c.b16 %v339, %v338
    %v349 = vpack.c.b16 %v341, %v340
    %358 = vxpose.xlu0.c.b16.start [1/8] %v342, 128
    %359 = vxpose.xlu0.c.b16.cont [2/8] %v343, 128
    %360 = vxpose.xlu0.c.b16.cont [3/8] %v344, 128
    %361 = vxpose.xlu0.c.b16.cont [4/8] %v345, 128
    %362 = vxpose.xlu0.c.b16.cont [5/8] %v346, 128
    %363 = vxpose.xlu0.c.b16.cont [6/8] %v347, 128
    %364 = vxpose.xlu0.c.b16.cont [7/8] %v348, 128
    %365 = vxpose.xlu0.c.b16.end [8/8] %v349, 128
    %v366 = vpop.trf.xlu0
    %v367 = vpop.trf.xlu0
    %v368 = vpop.trf.xlu0
    %v369 = vpop.trf.xlu0
    %v370 = vpop.trf.xlu0
    %v371 = vpop.trf.xlu0
    %v372 = vpop.trf.xlu0
    %v373 = vpop.trf.xlu0
    %374 = vmatprep.subr.bf16.mxu0 %v173
    %375 = vmatpush1.bf16.msra.mxu0 %v172
    %376 = vmatprep.subr.bf16.mxu0 %v175
    %377 = vmatpush1.bf16.msra.mxu0 %v174
    %378 = vmatprep.subr.bf16.mxu0 %v177
    %379 = vmatpush1.bf16.msra.mxu0 %v176
    %380 = vmatprep.subr.bf16.mxu0 %v179
    %381 = vmatpush1.bf16.msra.mxu0 %v178
    %382 = vmatprep.subr.bf16.mxu0 %v181
    %383 = vmatpush1.bf16.msra.mxu0 %v180
    %384 = vmatprep.subr.bf16.mxu0 %v183
    %385 = vmatpush1.bf16.msra.mxu0 %v182
    %386 = vmatprep.subr.bf16.mxu0 %v185
    %387 = vmatpush1.bf16.msra.mxu0 %v184
    %388 = vmatprep.subr.bf16.mxu0 %v187
    %389 = vmatpush1.bf16.msra.mxu0 %v186
    %390 = vmatprep.subr.bf16.mxu0 0
    %391 = vmatpush1.bf16.msra.mxu0 0
    %392 = vmatprep.subr.bf16.mxu0 0
    %393 = vmatpush1.bf16.msra.mxu0 0
    %394 = vmatprep.subr.bf16.mxu0 0
    %395 = vmatpush1.bf16.msra.mxu0 0
    %396 = vmatprep.subr.bf16.mxu0 0
    %397 = vmatpush1.bf16.msra.mxu0 0
    %398 = vmatprep.subr.bf16.mxu0 0
    %399 = vmatpush1.bf16.msra.mxu0 0
    %400 = vmatprep.subr.bf16.mxu0 0
    %401 = vmatpush1.bf16.msra.mxu0 0
    %402 = vmatprep.subr.bf16.mxu0 0
    %403 = vmatpush1.bf16.msra.mxu0 0
    %404 = vmatprep.subr.bf16.mxu0 0
    %405 = vmatpush1.bf16.msra.mxu0 0
    %406 = vmatprep.mubr.bf16.mxu0 0
    %407 = vmatmul.mubr.bf16.gmra.mrb[0].mxu0 %v366
    %v408 = vpop.f32.mrb[0].mxu0
    %v409 = vadd.f32 %v53, %v408
    %v410 = vpop.f32.mrb[0].mxu0
    %v411 = vadd.f32 %v57, %v410
    %v412 = vpop.f32.mrb[0].mxu0
    %v413 = vadd.f32 %v53, %v412
    %v414 = vpop.f32.mrb[0].mxu0
    %v415 = vadd.f32 %v57, %v414
    %416 = vmatprep.mubr.bf16.mxu0 0
    %417 = vmatmul.mubr.bf16.gmra.mrb[0].mxu0 %v367
    %v418 = vpop.f32.mrb[0].mxu0
    %v419 = vadd.f32 %v53, %v418
    %v420 = vpop.f32.mrb[0].mxu0
    %v421 = vadd.f32 %v57, %v420
    %v422 = vpop.f32.mrb[0].mxu0
    %v423 = vadd.f32 %v53, %v422
    %v424 = vpop.f32.mrb[0].mxu0
    %v425 = vadd.f32 %v57, %v424
    %426 = vmatprep.mubr.bf16.mxu0 0
    %427 = vmatmul.mubr.bf16.gmra.mrb[0].mxu0 %v368
    %v428 = vpop.f32.mrb[0].mxu0
    %v429 = vadd.f32 %v53, %v428
    %v430 = vpop.f32.mrb[0].mxu0
    %v431 = vadd.f32 %v57, %v430
    %v432 = vpop.f32.mrb[0].mxu0
    %v433 = vadd.f32 %v53, %v432
    %v434 = vpop.f32.mrb[0].mxu0
    %v435 = vadd.f32 %v57, %v434
    %436 = vmatprep.mubr.bf16.mxu0 0
    %437 = vmatmul.mubr.bf16.gmra.mrb[0].mxu0 %v369
    %v438 = vpop.f32.mrb[0].mxu0
    %v439 = vadd.f32 %v53, %v438
    %v440 = vpop.f32.mrb[0].mxu0
    %v441 = vadd.f32 %v57, %v440
    %v442 = vpop.f32.mrb[0].mxu0
    %v443 = vadd.f32 %v53, %v442
    %v444 = vpop.f32.mrb[0].mxu0
    %v445 = vadd.f32 %v57, %v444
    %446 = vdwg.mxu0
    %s447 = scalar_lea.vmem [#allocation2], 128
    %448 = vst [vmem:[%s447] sm:$0xff] %v409
    %449 = vst [vmem:[%s447 + $0x8] sm:$0xff] %v411
    %450 = vst [vmem:[%s447 + $0x10] sm:$0xff] %v413
    %451 = vst [vmem:[%s447 + $0x18] sm:$0xff] %v415
    %452 = vst [vmem:[%s447 + $0x20] sm:$0xff] %v419
    %453 = vst [vmem:[%s447 + $0x28] sm:$0xff] %v421
    %454 = vst [vmem:[%s447 + $0x30] sm:$0xff] %v423
    %455 = vst [vmem:[%s447 + $0x38] sm:$0xff] %v425
    %456 = vst [vmem:[%s447 + $0x40] sm:$0xff] %v429
    %457 = vst [vmem:[%s447 + $0x48] sm:$0xff] %v431
    %458 = vst [vmem:[%s447 + $0x50] sm:$0xff] %v433
    %459 = vst [vmem:[%s447 + $0x58] sm:$0xff] %v435
    %460 = vst [vmem:[%s447 + $0x60] sm:$0xff] %v439
    %461 = vst [vmem:[%s447 + $0x68] sm:$0xff] %v441
    %462 = vst [vmem:[%s447 + $0x70] sm:$0xff] %v443
    %463 = vst [vmem:[%s447 + $0x78] sm:$0xff] %v445
    // Predicated region
    $region14: #{tpu_custom_call.1} parent=1 // pred_check
      _
    $region15: #{tpu_custom_call.1} parent=1 // pred_check_branch
      %465 = sbr.rel (0) target = $region17
    $region16: #{tpu_custom_call.1} parent=1 // pred_region
      %s467 = ssub.s32 4096, 4096
      %468 = vsyncadd [#allocation3], %s467
      %s469 = sshll.u32 [#allocation2], 4
      %s470 = int_to_ptr.vmem [resolvable:$true] %s469
      %475 = dma.vmem_to_hbm [thread:$0]  %s470, 4096, %s3, [#allocation3], 256, 256, 16
    $region17: #{tpu_custom_call.1} parent=1 // pred_fallthru
      _
    // Predicated region
    $region18: #{tpu_custom_call.1} parent=1 // pred_check
      _
    $region19: #{tpu_custom_call.1} parent=1 // pred_check_branch
      %477 = sbr.rel (0) target = $region21
    $region20: #{tpu_custom_call.1} parent=1 // pred_region
      %478 = dma.done [#allocation3], 4096
    $region21: #{tpu_custom_call.1} parent=1 // pred_fallthru
      _
    %479 = vsyncpa [#allocation3], 1

</llo_original>
